<compile_context>
chip_gen: v6e
topology: v6e:2x2x1
jax: 0.10.0
libtpu: 0.0.40
codegen_flags: <defaults>
</compile_context>

<pallas_src>
import jax
import jax.numpy as jnp
from jax.experimental import pallas as pl
from jax.experimental.pallas import tpu as pltpu


def conv1d_relu_kernel(x_ref, w_ref, b_ref, o_ref):
    # x_ref: (1, C, L_x_pad)  one batch row, zero-padded along L (f32)
    # w_ref: (K, F, C)        resident weights, one (F, C) matrix per tap (f32)
    # b_ref: (F, 1)           resident bias (f32)
    # o_ref: (1, F, L_out_pad) output row, lane-dense (L_out_pad % 128 == 0)
    K = w_ref.shape[0]
    tile_l = o_ref.shape[2]

    # Fused im2col: K static lane-shifted slices, each feeding a small MXU dot,
    # accumulated in f32.  (Mem-bound kernel -> f32 compute is free.)
    acc = jnp.dot(w_ref[0], x_ref[0, :, 0:tile_l],
                  preferred_element_type=jnp.float32)
    for k in range(1, K):
        acc = acc + jnp.dot(w_ref[k], x_ref[0, :, k:k + tile_l],
                            preferred_element_type=jnp.float32)

    # Bias + ReLU epilogue stays in f32 (v5e-safe), single full-width store.
    o_ref[0] = jnp.maximum(acc + b_ref[...], 0.0).astype(o_ref.dtype)


def _round_up(a, b):
    return ((a + b - 1) // b) * b


def cnn_forward(x, weight, bias):
    """x: (N, C, L) f32; weight: (F, C, K); bias: (F,). Returns (N, F, L-K+1) f32."""
    N, C, L = x.shape
    F, _, K = weight.shape
    L_out = L - K + 1

    # Lane-dense output: pad L_out up to a multiple of 128.  The input row only
    # needs L_out_pad + K - 1 columns so every tap slice stays in bounds.
    L_out_pad = _round_up(L_out, 128)
    L_x_pad = L_out_pad + K - 1

    x = x.astype(jnp.float32)
    if L_x_pad > L:
        x = jnp.pad(x, ((0, 0), (0, 0), (0, L_x_pad - L)))  # zeros; sliced off below

    w_t = jnp.transpose(weight, (2, 0, 1)).astype(jnp.float32)   # (K, F, C)
    b2 = bias.reshape(F, 1).astype(jnp.float32)

    # VMEM budget: double-buffered input row + output row (+ tiny resident params),
    # clamped inside v7x's 64 MiB physical VMEM.
    blk_bytes = 4 * (C * L_x_pad + F * L_out_pad)          # one in + one out tile (f32)
    vmem_limit = int(min(max(4 * blk_bytes + (K * F * C + F) * 4 + (1 << 20),
                             8 << 20), 48 << 20))

    # TODO(synk): for extremely long sequences (C * L not fitting VMEM) the L axis
    # would additionally need halo tiling; not required at these model shapes.
    out_pad = pl.pallas_call(
        conv1d_relu_kernel,
        out_shape=jax.ShapeDtypeStruct((N, F, L_out_pad), jnp.float32),
        grid=(N,),                                   # >= 2 parallel steps feeds both v7x TCs
        in_specs=[
            pl.BlockSpec((1, C, L_x_pad), lambda n: (n, 0, 0)),   # streamed x row
            pl.BlockSpec((K, F, C), lambda n: (0, 0, 0)),         # resident weights
            pl.BlockSpec((F, 1), lambda n: (0, 0)),               # resident bias
        ],
        out_specs=pl.BlockSpec((1, F, L_out_pad), lambda n: (n, 0, 0)),
        compiler_params=pltpu.CompilerParams(
            dimension_semantics=("parallel",),
            vmem_limit_bytes=vmem_limit,
        ),
    )(x, w_t, b2)

    # Drop lane padding; output is already in PyTorch (N, F, L_out) layout.
    return out_pad[:, :, :L_out]


if __name__ == "__main__":
    # Shapes consistent with the module's forward:
    #   input_size (C_in) = 4, num_filters = 8, kernel_size = 3
    #   x: (batch=2, C_in=4, L=16)
    N, C_in, L = 2, 4, 16
    num_filters, kernel_size = 8, 3

    key = jax.random.PRNGKey(0)
    kx, kw, kb = jax.random.split(key, 3)

    x = jax.random.normal(kx, (N, C_in, L), dtype=jnp.float32)

    # Deterministic parameter init mimicking PyTorch Conv1d default:
    # U(-sqrt(k), sqrt(k)) with k = 1 / (C_in * kernel_size)
    bound = 1.0 / jnp.sqrt(jnp.float32(C_in * kernel_size))
    weight = jax.random.uniform(
        kw, (num_filters, C_in, kernel_size), dtype=jnp.float32,
        minval=-bound, maxval=bound)
    bias = jax.random.uniform(
        kb, (num_filters,), dtype=jnp.float32, minval=-bound, maxval=bound)

    out = cnn_forward(x, weight, bias)
    out = jax.block_until_ready(out)

    # Cross-check against a plain-JAX f32 conv reference.
    ref = jax.lax.conv_general_dilated(
        x, weight, window_strides=(1,), padding="VALID",
        dimension_numbers=("NCH", "OIH", "NCH"))
    ref = jnp.maximum(ref + bias[None, :, None], 0.0)

    assert out.shape == (N, num_filters, L - kernel_size + 1)
    # f32 MXU dot -> near-exact parity with the f32 reference.
    assert jnp.allclose(out, ref, atol=1e-5, rtol=1e-5), (
        float(jnp.max(jnp.abs(out - ref))))

    print("KERNEL_OK")
</pallas_src>

<mosaic_0001>
module attributes {stable_mosaic.version = 11 : i64} {
  func.func @conv1d_relu_kernel(%arg0: i32, %arg1: memref<1x4x130xf32, #tpu.memory_space<vmem>>, %arg2: memref<3x8x4xf32, #tpu.memory_space<vmem>>, %arg3: memref<8x1xf32, #tpu.memory_space<vmem>>, %arg4: memref<1x8x128xf32, #tpu.memory_space<vmem>>) attributes {dimension_semantics = [#tpu.dimension_semantics<parallel>], iteration_bounds = array<i64: 2>, scalar_prefetch = 0 : i64, scratch_operands = 0 : i64, tpu.core_type = #tpu.core_type<tc>, window_params = [{transform_indices = @transform_0, window_bounds = array<i64: 1, 4, 130>}, {pipeline_mode = #tpu.pipeline_mode<synchronous>, transform_indices = @transform_1, window_bounds = array<i64: 3, 8, 4>}, {pipeline_mode = #tpu.pipeline_mode<synchronous>, transform_indices = @transform_2, window_bounds = array<i64: 8, 1>}, {transform_indices = @transform_3, window_bounds = array<i64: 1, 8, 128>}]} {
    %c0 = arith.constant 0 : index
    %c0_0 = arith.constant 0 : index
    %c0_1 = arith.constant 0 : index
    %0 = vector.load %arg2[%c0, %c0_0, %c0_1] : memref<3x8x4xf32, #tpu.memory_space<vmem>>, vector<1x8x4xf32>
    %1 = vector.shape_cast %0 : vector<1x8x4xf32> to vector<8x4xf32>
    %c0_2 = arith.constant 0 : index
    %c0_3 = arith.constant 0 : index
    %c0_4 = arith.constant 0 : index
    %2 = vector.load %arg1[%c0_2, %c0_3, %c0_4] : memref<1x4x130xf32, #tpu.memory_space<vmem>>, vector<1x4x128xf32>
    %3 = vector.shape_cast %2 : vector<1x4x128xf32> to vector<4x128xf32>
    %cst = arith.constant dense<0.000000e+00> : vector<8x128xf32>
    %4 = tpu.matmul %1, %3, %cst {dimension_numbers = #tpu.dot_dimension_numbers<[1], [0], [0], [1], [0, 0, 1, 1], [], []>} : vector<8x4xf32>, vector<4x128xf32>, vector<8x128xf32> -> vector<8x128xf32>
    %c1 = arith.constant 1 : index
    %c0_5 = arith.constant 0 : index
    %c0_6 = arith.constant 0 : index
    %5 = vector.load %arg2[%c1, %c0_5, %c0_6] : memref<3x8x4xf32, #tpu.memory_space<vmem>>, vector<1x8x4xf32>
    %6 = vector.shape_cast %5 : vector<1x8x4xf32> to vector<8x4xf32>
    %c0_7 = arith.constant 0 : index
    %c0_8 = arith.constant 0 : index
    %c1_9 = arith.constant 1 : index
    %7 = vector.load %arg1[%c0_7, %c0_8, %c1_9] : memref<1x4x130xf32, #tpu.memory_space<vmem>>, vector<1x4x128xf32>
    %8 = vector.shape_cast %7 : vector<1x4x128xf32> to vector<4x128xf32>
    %cst_10 = arith.constant dense<0.000000e+00> : vector<8x128xf32>
    %9 = tpu.matmul %6, %8, %cst_10 {dimension_numbers = #tpu.dot_dimension_numbers<[1], [0], [0], [1], [0, 0, 1, 1], [], []>} : vector<8x4xf32>, vector<4x128xf32>, vector<8x128xf32> -> vector<8x128xf32>
    %10 = arith.addf %4, %9 : vector<8x128xf32>
    %c2 = arith.constant 2 : index
    %c0_11 = arith.constant 0 : index
    %c0_12 = arith.constant 0 : index
    %11 = vector.load %arg2[%c2, %c0_11, %c0_12] : memref<3x8x4xf32, #tpu.memory_space<vmem>>, vector<1x8x4xf32>
    %12 = vector.shape_cast %11 : vector<1x8x4xf32> to vector<8x4xf32>
    %c0_13 = arith.constant 0 : index
    %c0_14 = arith.constant 0 : index
    %c2_15 = arith.constant 2 : index
    %13 = vector.load %arg1[%c0_13, %c0_14, %c2_15] : memref<1x4x130xf32, #tpu.memory_space<vmem>>, vector<1x4x128xf32>
    %14 = vector.shape_cast %13 : vector<1x4x128xf32> to vector<4x128xf32>
    %cst_16 = arith.constant dense<0.000000e+00> : vector<8x128xf32>
    %15 = tpu.matmul %12, %14, %cst_16 {dimension_numbers = #tpu.dot_dimension_numbers<[1], [0], [0], [1], [0, 0, 1, 1], [], []>} : vector<8x4xf32>, vector<4x128xf32>, vector<8x128xf32> -> vector<8x128xf32>
    %16 = arith.addf %10, %15 : vector<8x128xf32>
    %c0_17 = arith.constant 0 : index
    %c0_18 = arith.constant 0 : index
    %17 = vector.load %arg3[%c0_17, %c0_18] : memref<8x1xf32, #tpu.memory_space<vmem>>, vector<8x1xf32>
    %18 = vector.broadcast %17 : vector<8x1xf32> to vector<8x128xf32>
    %19 = arith.addf %16, %18 : vector<8x128xf32>
    %cst_19 = arith.constant 0.000000e+00 : f32
    %20 = vector.broadcast %cst_19 : f32 to vector<8x128xf32>
    %21 = arith.maximumf %19, %20 : vector<8x128xf32>
    %c0_20 = arith.constant 0 : index
    %c0_21 = arith.constant 0 : index
    %c0_22 = arith.constant 0 : index
    %22 = vector.load %arg4[%c0_20, %c0_21, %c0_22] : memref<1x8x128xf32, #tpu.memory_space<vmem>>, vector<1x8x128xf32>
    %23 = vector.shape_cast %22 : vector<1x8x128xf32> to vector<8x128xf32>
    %24 = vector.shape_cast %21 : vector<8x128xf32> to vector<1x8x128xf32>
    tpu.vector_store %arg4[%c0_20, %c0_21, %c0_22], %24 {strides = array<i32>} : memref<1x8x128xf32, #tpu.memory_space<vmem>>, vector<1x8x128xf32>,
    return
  }
  func.func @transform_0(%arg0: i32) -> (i32, i32, i32) {
    %c0_i32 = arith.constant 0 : i32
    %c0_i32_0 = arith.constant 0 : i32
    %c0_i32_1 = arith.constant 0 : i32
    return %arg0, %c0_i32, %c0_i32_0 : i32, i32, i32
  }
  func.func @transform_1(%arg0: i32) -> (i32, i32, i32) {
    %c0_i32 = arith.constant 0 : i32
    %c0_i32_0 = arith.constant 0 : i32
    %c0_i32_1 = arith.constant 0 : i32
    %c0_i32_2 = arith.constant 0 : i32
    return %c0_i32, %c0_i32_0, %c0_i32_1 : i32, i32, i32
  }
  func.func @transform_2(%arg0: i32) -> (i32, i32) {
    %c0_i32 = arith.constant 0 : i32
    %c0_i32_0 = arith.constant 0 : i32
    %c0_i32_1 = arith.constant 0 : i32
    return %c0_i32, %c0_i32_0 : i32, i32
  }
  func.func @transform_3(%arg0: i32) -> (i32, i32, i32) {
    %c0_i32 = arith.constant 0 : i32
    %c0_i32_0 = arith.constant 0 : i32
    %c0_i32_1 = arith.constant 0 : i32
    return %arg0, %c0_i32, %c0_i32_0 : i32, i32, i32
  }
}

</mosaic_0001>

<llo_original>
// kernel: tpu_custom_call.1
$region0: #{tpu_custom_call.1}
  #allocation0 [shape = 'u32[]', space=smem, size = 0x4, offset = 0x4, fixed_abs, tag = 'smem constant byte address 0x4 - core index']
  #allocation1 [shape = 'u32[144,128]{1,0:T(1,128)}', space=vmem, size = 0x12000, scoped, tag = 'internal scratch']
  %s0 = inlined_call_operand.vmem [shape: f32[2,4,130], index: 0, kind: input, shape index: {}]
  %s1 = inlined_call_operand.vmem [shape: f32[3,8,4], index: 1, kind: input, shape index: {}]
  %s2 = inlined_call_operand.vmem [shape: f32[8,1], index: 2, kind: input, shape index: {}]
  %s3 = inlined_call_operand.hbm [shape: f32[2,8,128], index: 3, kind: output, shape index: {}]
  %s4 = sld [smem:[#allocation0]]
  $region45: #{tpu_custom_call.1} parent=0
    _
  %s6 = ssub.s32 1, %s4
  %s7 = scalar_select 0, %s6, %s4
  $region1: #{tpu_custom_call.1} parent=0
    #allocation2 [shape = 'u8[8192]{0}', space=vmem, size = 0x2000, scoped, tag = 'output window, operand 0']
    #allocation3 [shape = 's32[2]{0}', space=sflag, size = 0x8, scoped, tag = 'scoped memory for tpu_custom_call.1']
    %8 = vsyncpa [#allocation3], 0
    %s9 = scalar_lea.sflag [#allocation3], 1
    %10 = vsyncpa %s9, 0
    loop: start=0, step=1, limit=4
    $region2: #{tpu_custom_call.1} parent=1 // loop_pre_header
      _
    $region3: #{tpu_custom_call.1} parent=1 // loop_header
      %s12 = sphi 0, %s16
      %p13 = scmp.ge.s32.totalorder %s12, 4
      %s22 = sphi 0, %s24
      %s25 = sphi 0, %s22
      %s26 = sphi 0, %s25
      %s42 = sphi 0, %s26
      %s46 = sphi 0, %s46
      %s48 = sphi 0, %s46
      %s49 = sphi 0, %s48
      %s63 = sphi 0, %s49
      %s67 = sphi 0, %s67
      %s69 = sphi 0, %s67
      %s70 = sphi 0, %s69
      %s84 = sphi 0, %s70
      %s90 = sphi 0, %s92
      %s93 = sphi 0, %s90
      %s94 = sphi 0, %s93
      %s110 = sphi 0, %s94
    $region4: #{tpu_custom_call.1} parent=1 // loop_header_branch
      %15 = sbr.rel (%p13) target = $region8
    $region5: #{tpu_custom_call.1} parent=1 // loop_body
      %s17 = ssub.s32 %s12, 1
      %s18 = ssub.s32 %s12, 2
      %s19 = sadd.s32 %s12, 1
      %s20 = ssub.s32 %s12, %s19
      %p21 = scmp.eq.s32.totalorder %s20, 0
      %s23 = sadd.s32 %s22, 1
      %s24 = scalar_select %p21, %s22, %s23
      %p27 = pneg %p21
      %p28 = scmp.eq.s32.totalorder %s12, 1
      %p29 = por %p27, %p28
      %p30 = scmp.ne.s32.totalorder %s22, %s25
      %p31 = scmp.eq.s32.totalorder %s12, 0
      %p32 = por %p30, %p31
      %p33 = scmp.ne.s32.totalorder %s22, %s25
      %p34 = scmp.eq.s32.totalorder %s17, 1
      %p35 = por %p33, %p34
      %p36 = scmp.ne.s32.totalorder %s25, %s26
      %p37 = scmp.eq.s32.totalorder %s17, 0
      %p38 = por %p36, %p37
      %p39 = scmp.ne.s32.totalorder %s25, %s26
      %p40 = scmp.eq.s32.totalorder %s18, 1
      %p41 = por %p39, %p40
      %p43 = scmp.ne.s32.totalorder %s26, %s42
      %p44 = scmp.eq.s32.totalorder %s18, 0
      %p45 = por %p43, %p44
      %s47 = sadd.s32 %s46, 1
      %p50 = scmp.eq.s32.totalorder %s12, 1
      %p51 = scmp.ne.s32.totalorder %s46, %s48
      %p52 = scmp.eq.s32.totalorder %s12, 0
      %p53 = por %p51, %p52
      %p54 = scmp.ne.s32.totalorder %s46, %s48
      %p55 = scmp.eq.s32.totalorder %s17, 1
      %p56 = por %p54, %p55
      %p57 = scmp.ne.s32.totalorder %s48, %s49
      %p58 = scmp.eq.s32.totalorder %s17, 0
      %p59 = por %p57, %p58
      %p60 = scmp.ne.s32.totalorder %s48, %s49
      %p61 = scmp.eq.s32.totalorder %s18, 1
      %p62 = por %p60, %p61
      %p64 = scmp.ne.s32.totalorder %s49, %s63
      %p65 = scmp.eq.s32.totalorder %s18, 0
      %p66 = por %p64, %p65
      %s68 = sadd.s32 %s67, 1
      %p71 = scmp.eq.s32.totalorder %s12, 1
      %p72 = scmp.ne.s32.totalorder %s67, %s69
      %p73 = scmp.eq.s32.totalorder %s12, 0
      %p74 = por %p72, %p73
      %p75 = scmp.ne.s32.totalorder %s67, %s69
      %p76 = scmp.eq.s32.totalorder %s17, 1
      %p77 = por %p75, %p76
      %p78 = scmp.ne.s32.totalorder %s69, %s70
      %p79 = scmp.eq.s32.totalorder %s17, 0
      %p80 = por %p78, %p79
      %p81 = scmp.ne.s32.totalorder %s69, %s70
      %p82 = scmp.eq.s32.totalorder %s18, 1
      %p83 = por %p81, %p82
      %p85 = scmp.ne.s32.totalorder %s70, %s84
      %p86 = scmp.eq.s32.totalorder %s18, 0
      %p87 = por %p85, %p86
      %s88 = ssub.s32 %s12, %s19
      %p89 = scmp.eq.s32.totalorder %s88, 0
      %s91 = sadd.s32 %s90, 1
      %s92 = scalar_select %p89, %s90, %s91
      %p95 = pneg %p89
      %p96 = scmp.eq.s32.totalorder %s12, 1
      %p97 = por %p95, %p96
      %p98 = scmp.ne.s32.totalorder %s90, %s93
      %p99 = scmp.eq.s32.totalorder %s12, 0
      %p100 = por %p98, %p99
      %p101 = scmp.ne.s32.totalorder %s90, %s93
      %p102 = scmp.eq.s32.totalorder %s17, 1
      %p103 = por %p101, %p102
      %p104 = scmp.ne.s32.totalorder %s93, %s94
      %p105 = scmp.eq.s32.totalorder %s17, 0
      %p106 = por %p104, %p105
      %p107 = scmp.ne.s32.totalorder %s93, %s94
      %p108 = scmp.eq.s32.totalorder %s18, 1
      %p109 = por %p107, %p108
      %p111 = scmp.ne.s32.totalorder %s94, %s110
      %p112 = scmp.eq.s32.totalorder %s18, 0
      %p113 = por %p111, %p112
      %p114 = scmp.le.s32.totalorder 1, %s12
      %p115 = scmp.lt.s32.totalorder %s12, 3
      %p116 = pnand %p114, %p115
      %p117 = pneg %p116
      // Predicated region
      $region9: #{tpu_custom_call.1} parent=5 // pred_check
        _
      $region10: #{tpu_custom_call.1} parent=5 // pred_check_branch
        %119 = sbr.rel (%p116) target = $region12
      $region11: #{tpu_custom_call.1} parent=5 // pred_region
        %s120 = ssub.s32 %s12, 1
        // Predicated region
        $region13: #{tpu_custom_call.1} parent=11 // pred_check
          %p121 = pneg %p59
        $region14: #{tpu_custom_call.1} parent=11 // pred_check_branch
          %123 = sbr.rel (%p121) target = $region16
        $region15: #{tpu_custom_call.1} parent=11 // pred_region
          _
        $region16: #{tpu_custom_call.1} parent=11 // pred_fallthru
          _
        // Predicated region
        $region17: #{tpu_custom_call.1} parent=11 // pred_check
          %p124 = pneg %p80
        $region18: #{tpu_custom_call.1} parent=11 // pred_check_branch
          %126 = sbr.rel (%p124) target = $region20
        $region19: #{tpu_custom_call.1} parent=11 // pred_region
          _
        $region20: #{tpu_custom_call.1} parent=11 // pred_fallthru
          _
      $region12: #{tpu_custom_call.1} parent=5 // pred_fallthru
        _
      %p127 = scmp.lt.s32.totalorder %s12, 2
      // Predicated region
      $region21: #{tpu_custom_call.1} parent=5 // pred_check
        %p128 = pneg %p127
      $region22: #{tpu_custom_call.1} parent=5 // pred_check_branch
        %130 = sbr.rel (%p128) target = $region24
      $region23: #{tpu_custom_call.1} parent=5 // pred_region
        // Predicated region
        $region25: #{tpu_custom_call.1} parent=23 // pred_check
          %p131 = pneg %p32
        $region26: #{tpu_custom_call.1} parent=23 // pred_check_branch
          %133 = sbr.rel (%p131) target = $region28
        $region27: #{tpu_custom_call.1} parent=23 // pred_region
          %p134 = scmp.lt.s32.totalorder %s12, 1
          %s135 = scalar_select %p134, %s12, 1
          %s136 = smul.addr %s135, 2
          %s137 = smul.addr %s136, 4
          %s138 = scalar_lea.vmem %s0, %s137
        $region28: #{tpu_custom_call.1} parent=23 // pred_fallthru
          _
      $region24: #{tpu_custom_call.1} parent=5 // pred_fallthru
        _
      %p139 = scmp.le.s32.totalorder 1, %s12
      %p140 = scmp.lt.s32.totalorder %s12, 3
      %p141 = pnand %p139, %p140
      %p142 = pneg %p141
      // Predicated region
      $region29: #{tpu_custom_call.1} parent=5 // pred_check
        _
      $region30: #{tpu_custom_call.1} parent=5 // pred_check_branch
        %144 = sbr.rel (%p141) target = $region32
      $region31: #{tpu_custom_call.1} parent=5 // pred_region
        %s145 = ssub.s32 %s12, 1
        %p146 = scmp.lt.s32.totalorder %s17, 1
        %s147 = scalar_select %p146, %s17, 1
        %s148 = smul.addr %s147, 2
        %s149 = smul.addr %s148, 4
        %s150 = scalar_lea.vmem %s0, %s149
        %p151 = pneg %p38
        %p152 = pneg %p35
        %p153 = pneg %p59
        %p154 = pneg %p56
        %p155 = pneg %p80
        %p156 = pneg %p77
        %p157 = pneg %p106
        %p158 = pneg %p103
        %s159 = sand.u32 %s93, 1
        %s160 = scalar_lea.sflag [#allocation3], %s159
        %s161 = sand.u32 %s93, 1
        %s162 = smul.addr %s161, 8
        %s163 = scalar_lea.vmem [#allocation2], %s162
        %p164 = scmp.lt.s32.totalorder %s17, 1
        %s165 = scalar_select %p164, %s17, 1
        %s166 = smul.addr %s165, 2
        %s167 = smul.addr %s166, 4
        %s168 = scalar_lea.vmem %s0, %s167
        %v169 = vld [vmem:[%s1] sm:$0xff]
        %v170 = vld [vmem:[%s168] sm:$0xf]
        %s171 = scalar_lea.vmem %s1, 8
        %v172 = vld [vmem:[%s171] sm:$0xff]
        %v173 = vld [vmem:[%s168] sm:$0xff]
        %v175 = vcombine.high %v173, %v173
        %176 = vrot.lane.b32.xlu0 %v173, 127
        %v177 = vpop.permute.xlu0 %176
        %178 = vrot.lane.b32.xlu0 %v175, 127
        %v179 = vpop.permute.xlu0 %178
        %vm180 = vcmask 1039360
        %v181 = vsel %vm180, %v177, %v179
        %vm182 = vcmask 31744
        %v184 = vsel %vm182, %v172, 0
        %vm186 = vcmask 1043456
        %v187 = vsel %vm186, %v181, 0
        %189 = vmatprep.subr.mxu0 0.0
        %190 = vmatpush1.msra.mxu0 0.0
        %191 = vmatprep.subr.mxu0 0.0
        %192 = vmatpush1.msra.mxu0 0.0
        %193 = vmatprep.subr.mxu0 0.0
        %194 = vmatpush1.msra.mxu0 0.0
        %195 = vmatprep.subr.mxu0 0.0
        %196 = vmatpush1.msra.mxu0 0.0
        %197 = vmatprep.subr.mxu0 0.0
        %198 = vmatpush1.msra.mxu0 0.0
        %199 = vmatprep.subr.mxu0 0.0
        %200 = vmatpush1.msra.mxu0 0.0
        %201 = vmatprep.subr.mxu0 0.0
        %202 = vmatpush1.msra.mxu0 0.0
        %203 = vmatprep.subr.mxu0 0.0
        %204 = vmatpush1.msra.mxu0 0.0
        %205 = vmatprep.subr.mxu0 0.0
        %206 = vmatpush1.msra.mxu0 0.0
        %207 = vmatprep.subr.mxu0 0.0
        %208 = vmatpush1.msra.mxu0 0.0
        %209 = vmatprep.subr.mxu0 0.0
        %210 = vmatpush1.msra.mxu0 0.0
        %211 = vmatprep.subr.mxu0 0.0
        %212 = vmatpush1.msra.mxu0 0.0
        %213 = vmatprep.subr.mxu0 0.0
        %214 = vmatpush1.msra.mxu0 0.0
        %215 = vmatprep.subr.mxu0 0.0
        %216 = vmatpush1.msra.mxu0 0.0
        %217 = vmatprep.subr.mxu0 0.0
        %218 = vmatpush1.msra.mxu0 0.0
        %219 = vmatprep.subr.mxu0 0.0
        %220 = vmatpush1.msra.mxu0 %v187
        %221 = vmatprep.subr.mxu0 0.0
        %222 = vmatpush2.msra.mxu0 0.0
        %223 = vmatprep.subr.mxu0 0.0
        %224 = vmatpush2.msra.mxu0 0.0
        %225 = vmatprep.subr.mxu0 0.0
        %226 = vmatpush2.msra.mxu0 0.0
        %227 = vmatprep.subr.mxu0 0.0
        %228 = vmatpush2.msra.mxu0 0.0
        %229 = vmatprep.subr.mxu0 0.0
        %230 = vmatpush2.msra.mxu0 0.0
        %231 = vmatprep.subr.mxu0 0.0
        %232 = vmatpush2.msra.mxu0 0.0
        %233 = vmatprep.subr.mxu0 0.0
        %234 = vmatpush2.msra.mxu0 0.0
        %235 = vmatprep.subr.mxu0 0.0
        %236 = vmatpush2.msra.mxu0 0.0
        %237 = vmatprep.subr.mxu0 0.0
        %238 = vmatpush2.msra.mxu0 0.0
        %239 = vmatprep.subr.mxu0 0.0
        %240 = vmatpush2.msra.mxu0 0.0
        %241 = vmatprep.subr.mxu0 0.0
        %242 = vmatpush2.msra.mxu0 0.0
        %243 = vmatprep.subr.mxu0 0.0
        %244 = vmatpush2.msra.mxu0 0.0
        %245 = vmatprep.subr.mxu0 0.0
        %246 = vmatpush2.msra.mxu0 0.0
        %247 = vmatprep.subr.mxu0 0.0
        %248 = vmatpush2.msra.mxu0 0.0
        %249 = vmatprep.subr.mxu0 0.0
        %250 = vmatpush2.msra.mxu0 0.0
        %251 = vmatprep.subr.mxu0 0.0
        %252 = vmatpush2.msra.mxu0 0.0
        %253 = vmatprep.mubr.f32.mxu0 0.0
        %254 = vmatmul.mubr.f32.gmra.mxu0 %v184
        %v255 = vpop.f32.mrf.mxu0
        %v256 = vadd.f32 0.0, %v255
        %v257 = vpop.f32.mrf.mxu0
        %258 = vdwg.mxu0
        %v260 = vsel %vm182, %v169, 0
        %v263 = vsel %vm186, %v170, 0
        %265 = vmatprep.subr.mxu0 0.0
        %266 = vmatpush1.msra.mxu0 0.0
        %267 = vmatprep.subr.mxu0 0.0
        %268 = vmatpush1.msra.mxu0 0.0
        %269 = vmatprep.subr.mxu0 0.0
        %270 = vmatpush1.msra.mxu0 0.0
        %271 = vmatprep.subr.mxu0 0.0
        %272 = vmatpush1.msra.mxu0 0.0
        %273 = vmatprep.subr.mxu0 0.0
        %274 = vmatpush1.msra.mxu0 0.0
        %275 = vmatprep.subr.mxu0 0.0
        %276 = vmatpush1.msra.mxu0 0.0
        %277 = vmatprep.subr.mxu0 0.0
        %278 = vmatpush1.msra.mxu0 0.0
        %279 = vmatprep.subr.mxu0 0.0
        %280 = vmatpush1.msra.mxu0 0.0
        %281 = vmatprep.subr.mxu0 0.0
        %282 = vmatpush1.msra.mxu0 0.0
        %283 = vmatprep.subr.mxu0 0.0
        %284 = vmatpush1.msra.mxu0 0.0
        %285 = vmatprep.subr.mxu0 0.0
        %286 = vmatpush1.msra.mxu0 0.0
        %287 = vmatprep.subr.mxu0 0.0
        %288 = vmatpush1.msra.mxu0 0.0
        %289 = vmatprep.subr.mxu0 0.0
        %290 = vmatpush1.msra.mxu0 0.0
        %291 = vmatprep.subr.mxu0 0.0
        %292 = vmatpush1.msra.mxu0 0.0
        %293 = vmatprep.subr.mxu0 0.0
        %294 = vmatpush1.msra.mxu0 0.0
        %295 = vmatprep.subr.mxu0 0.0
        %296 = vmatpush1.msra.mxu0 %v263
        %297 = vmatprep.subr.mxu0 0.0
        %298 = vmatpush2.msra.mxu0 0.0
        %299 = vmatprep.subr.mxu0 0.0
        %300 = vmatpush2.msra.mxu0 0.0
        %301 = vmatprep.subr.mxu0 0.0
        %302 = vmatpush2.msra.mxu0 0.0
        %303 = vmatprep.subr.mxu0 0.0
        %304 = vmatpush2.msra.mxu0 0.0
        %305 = vmatprep.subr.mxu0 0.0
        %306 = vmatpush2.msra.mxu0 0.0
        %307 = vmatprep.subr.mxu0 0.0
        %308 = vmatpush2.msra.mxu0 0.0
        %309 = vmatprep.subr.mxu0 0.0
        %310 = vmatpush2.msra.mxu0 0.0
        %311 = vmatprep.subr.mxu0 0.0
        %312 = vmatpush2.msra.mxu0 0.0
        %313 = vmatprep.subr.mxu0 0.0
        %314 = vmatpush2.msra.mxu0 0.0
        %315 = vmatprep.subr.mxu0 0.0
        %316 = vmatpush2.msra.mxu0 0.0
        %317 = vmatprep.subr.mxu0 0.0
        %318 = vmatpush2.msra.mxu0 0.0
        %319 = vmatprep.subr.mxu0 0.0
        %320 = vmatpush2.msra.mxu0 0.0
        %321 = vmatprep.subr.mxu0 0.0
        %322 = vmatpush2.msra.mxu0 0.0
        %323 = vmatprep.subr.mxu0 0.0
        %324 = vmatpush2.msra.mxu0 0.0
        %325 = vmatprep.subr.mxu0 0.0
        %326 = vmatpush2.msra.mxu0 0.0
        %327 = vmatprep.subr.mxu0 0.0
        %328 = vmatpush2.msra.mxu0 0.0
        %329 = vmatprep.mubr.f32.mxu0 0.0
        %330 = vmatmul.mubr.f32.gmra.mxu0 %v260
        %v331 = vpop.f32.mrf.mxu0
        %v332 = vadd.f32 %v256, %v331
        %v333 = vpop.f32.mrf.mxu0
        %334 = vdwg.mxu0
        %s335 = scalar_lea.vmem %s1, 16
        %v336 = vld [vmem:[%s335] sm:$0xff]
        %v337 = vld [vmem:[%s168] sm:$0xff]
        %v339 = vcombine.high %v337, %v337
        %340 = vrot.lane.b32.xlu0 %v337, 126
        %v341 = vpop.permute.xlu0 %340
        %342 = vrot.lane.b32.xlu0 %v339, 126
        %v343 = vpop.permute.xlu0 %342
        %vm344 = vcmask 1031168
        %v345 = vsel %vm344, %v341, %v343
        %v347 = vsel %vm182, %v336, 0
        %v349 = vsel %vm186, %v345, 0
        %351 = vmatprep.subr.mxu0 0.0
        %352 = vmatpush1.msra.mxu0 0.0
        %353 = vmatprep.subr.mxu0 0.0
        %354 = vmatpush1.msra.mxu0 0.0
        %355 = vmatprep.subr.mxu0 0.0
        %356 = vmatpush1.msra.mxu0 0.0
        %357 = vmatprep.subr.mxu0 0.0
        %358 = vmatpush1.msra.mxu0 0.0
        %359 = vmatprep.subr.mxu0 0.0
        %360 = vmatpush1.msra.mxu0 0.0
        %361 = vmatprep.subr.mxu0 0.0
        %362 = vmatpush1.msra.mxu0 0.0
        %363 = vmatprep.subr.mxu0 0.0
        %364 = vmatpush1.msra.mxu0 0.0
        %365 = vmatprep.subr.mxu0 0.0
        %366 = vmatpush1.msra.mxu0 0.0
        %367 = vmatprep.subr.mxu0 0.0
        %368 = vmatpush1.msra.mxu0 0.0
        %369 = vmatprep.subr.mxu0 0.0
        %370 = vmatpush1.msra.mxu0 0.0
        %371 = vmatprep.subr.mxu0 0.0
        %372 = vmatpush1.msra.mxu0 0.0
        %373 = vmatprep.subr.mxu0 0.0
        %374 = vmatpush1.msra.mxu0 0.0
        %375 = vmatprep.subr.mxu0 0.0
        %376 = vmatpush1.msra.mxu0 0.0
        %377 = vmatprep.subr.mxu0 0.0
        %378 = vmatpush1.msra.mxu0 0.0
        %379 = vmatprep.subr.mxu0 0.0
        %380 = vmatpush1.msra.mxu0 0.0
        %381 = vmatprep.subr.mxu0 0.0
        %382 = vmatpush1.msra.mxu0 %v349
        %383 = vmatprep.subr.mxu0 0.0
        %384 = vmatpush2.msra.mxu0 0.0
        %385 = vmatprep.subr.mxu0 0.0
        %386 = vmatpush2.msra.mxu0 0.0
        %387 = vmatprep.subr.mxu0 0.0
        %388 = vmatpush2.msra.mxu0 0.0
        %389 = vmatprep.subr.mxu0 0.0
        %390 = vmatpush2.msra.mxu0 0.0
        %391 = vmatprep.subr.mxu0 0.0
        %392 = vmatpush2.msra.mxu0 0.0
        %393 = vmatprep.subr.mxu0 0.0
        %394 = vmatpush2.msra.mxu0 0.0
        %395 = vmatprep.subr.mxu0 0.0
        %396 = vmatpush2.msra.mxu0 0.0
        %397 = vmatprep.subr.mxu0 0.0
        %398 = vmatpush2.msra.mxu0 0.0
        %399 = vmatprep.subr.mxu0 0.0
        %400 = vmatpush2.msra.mxu0 0.0
        %401 = vmatprep.subr.mxu0 0.0
        %402 = vmatpush2.msra.mxu0 0.0
        %403 = vmatprep.subr.mxu0 0.0
        %404 = vmatpush2.msra.mxu0 0.0
        %405 = vmatprep.subr.mxu0 0.0
        %406 = vmatpush2.msra.mxu0 0.0
        %407 = vmatprep.subr.mxu0 0.0
        %408 = vmatpush2.msra.mxu0 0.0
        %409 = vmatprep.subr.mxu0 0.0
        %410 = vmatpush2.msra.mxu0 0.0
        %411 = vmatprep.subr.mxu0 0.0
        %412 = vmatpush2.msra.mxu0 0.0
        %413 = vmatprep.subr.mxu0 0.0
        %414 = vmatpush2.msra.mxu0 0.0
        %415 = vmatprep.mubr.f32.mxu0 0.0
        %416 = vmatmul.mubr.f32.gmra.mxu0 %v347
        %v417 = vpop.f32.mrf.mxu0
        %v418 = vadd.f32 0.0, %v417
        %v419 = vpop.f32.mrf.mxu0
        %420 = vdwg.mxu0
        %v421 = vadd.f32 %v332, %v418
        %v422 = vld [vmem:[%s2] sm:$0xff]
        %424 = vset.pattern.permute.xlu0 0
        %425 = vperm.xlu0 %424, %v422
        %v426 = vpop.permute.xlu0 %425
        %v428 = vadd.f32 %v421, %v426
        %v429 = vmax.f32 %v428, 0.0
        %430 = vst [vmem:[%s163] sm:$0xff] %v429
        %s431 = sand.u32 %s93, 1
        %s432 = scalar_lea.sflag [#allocation3], %s431
        %s433 = sand.u32 %s93, 1
        %s434 = smul.addr %s433, 8
        %s435 = scalar_lea.vmem [#allocation2], %s434
        // Predicated region
        $region33: #{tpu_custom_call.1} parent=31 // pred_check
          %p436 = pneg %p103
        $region34: #{tpu_custom_call.1} parent=31 // pred_check_branch
          %438 = sbr.rel (%p436) target = $region36
        $region35: #{tpu_custom_call.1} parent=31 // pred_region
          %s440 = ssub.s32 128, 128
          %441 = vsyncadd %s432, %s440
          %s442 = smul.addr %s17, 128
          %s443 = scalar_lea.hbm %s3, %s442
          %s445 = sshll.u32 %s435, 4
          %s446 = int_to_ptr.vmem [resolvable:$true] %s445
          %448 = dma.vmem_to_hbm [thread:$0]  %s446, 128, %s443, %s432
        $region36: #{tpu_custom_call.1} parent=31 // pred_fallthru
          _
      $region32: #{tpu_custom_call.1} parent=5 // pred_fallthru
        _
      %p449 = scmp.le.s32.totalorder 2, %s12
      // Predicated region
      $region37: #{tpu_custom_call.1} parent=5 // pred_check
        %p450 = pneg %p449
      $region38: #{tpu_custom_call.1} parent=5 // pred_check_branch
        %452 = sbr.rel (%p450) target = $region40
      $region39: #{tpu_custom_call.1} parent=5 // pred_region
        %s453 = ssub.s32 %s12, 2
        // Predicated region
        $region41: #{tpu_custom_call.1} parent=39 // pred_check
          %p454 = pneg %p109
        $region42: #{tpu_custom_call.1} parent=39 // pred_check_branch
          %456 = sbr.rel (%p454) target = $region44
        $region43: #{tpu_custom_call.1} parent=39 // pred_region
          %s457 = sand.u32 %s94, 1
          %s458 = scalar_lea.sflag [#allocation3], %s457
          %s459 = sand.u32 %s94, 1
          %s460 = smul.addr %s459, 8
          %s461 = scalar_lea.vmem [#allocation2], %s460
          %462 = dma.done %s458, 128
        $region44: #{tpu_custom_call.1} parent=39 // pred_fallthru
          _
      $region40: #{tpu_custom_call.1} parent=5 // pred_fallthru
        _
    $region6: #{tpu_custom_call.1} parent=1 // loop_footer
      %s16 = sadd.s32 1, %s12
    $region7: #{tpu_custom_call.1} parent=1 // loop_footer_branch
      %11 = sbr.rel target = $region3
    $region8: #{tpu_custom_call.1} parent=1 // loop_exit
      _
    %463 = vsyncpa [#allocation3], 1
    %s464 = scalar_lea.sflag [#allocation3], 1
    %465 = vsyncpa %s464, 1

</llo_original>
